<compile_context>
chip_gen: v7x
topology: tpu7x:2x2x1
jax: 0.10.0
libtpu: 0.0.40
codegen_flags: <defaults>
</compile_context>

<pallas_src>
import functools

import jax
import jax.numpy as jnp
from jax.experimental import pallas as pl
from jax.experimental.pallas import tpu as pltpu

LANE = 128
ACC_ROWS = 32  # 4 independent (8,128) accumulator vregs


def _round_up(a, b):
    return ((a + b - 1) // b) * b


def _charbonnier_kernel(x_ref, y_ref, o_ref, acc_ref, *, eps, rows_total,
                        tile_rows, num_blocks, blocks_per_core,
                        has_pad_blocks, last_block_partial, bf16_diff):
    c = pl.program_id(0)                 # (virtual) core index
    j = pl.program_id(1)                 # block index within this core
    g = c * blocks_per_core + j          # global row-block index

    # Zero this core's accumulator at the start of its block range.
    @pl.when(j == 0)
    def _():
        acc_ref[...] = jnp.zeros_like(acc_ref)

    def accumulate(mask_rows):
        x = x_ref[...]
        y = y_ref[...]
        if bf16_diff:
            # bf16 subtract on the bf16 VALU (v6e/v7x); matches torch's bf16 sub.
            diff = (x - y).astype(jnp.float32)
        else:
            diff = x.astype(jnp.float32) - y.astype(jnp.float32)
        val = jnp.sqrt(diff * diff + jnp.float32(eps))
        if mask_rows:
            # Block-relative row comparison (no absolute flat index -> no
            # int32 overflow for very large inputs).
            row = jax.lax.broadcasted_iota(jnp.int32, (tile_rows, LANE), 0)
            rows_rem = rows_total - g * tile_rows
            val = jnp.where(row < rows_rem, val, jnp.float32(0.0))
        # Fold the block into 4 independent (8,128) partial-sum vregs.
        acc_ref[...] += jnp.sum(
            val.reshape(tile_rows // ACC_ROWS, ACC_ROWS, LANE), axis=0)

    if last_block_partial:
        is_tail = g == (num_blocks - 1)
        fast = jnp.logical_not(is_tail)
        if has_pad_blocks:
            fast = jnp.logical_and(fast, g < num_blocks)

        @pl.when(fast)          # steady state: unmasked, purely mem-bound
        def _():
            accumulate(False)

        @pl.when(is_tail)       # cold path: only the block holding the tail
        def _():
            accumulate(True)
    else:
        if has_pad_blocks:
            @pl.when(g < num_blocks)
            def _():
                accumulate(False)
        else:
            accumulate(False)

    # Emit this core's lane-dense partial slab once, after its last block.
    @pl.when(j == blocks_per_core - 1)
    def _():
        o_ref[0] = acc_ref[...]


def _pointwise(xs, ys, eps):
    if xs.dtype == jnp.bfloat16:
        diff = (xs - ys).astype(jnp.float32)
    else:
        diff = xs.astype(jnp.float32) - ys.astype(jnp.float32)
    return jnp.sqrt(diff * diff + jnp.float32(eps))


def charbonnier_loss(x, y, eps=1e-6, tile_rows=4096):
    """sum(sqrt((x - y)^2 + eps)) over all elements (PyTorch CharbonnierLoss)."""
    assert x.shape == y.shape, (x.shape, y.shape)
    assert x.dtype == y.dtype, (x.dtype, y.dtype)
    n = int(x.size)

    xf = x.reshape(-1)
    yf = y.reshape(-1)

    rows = n // LANE
    rem = n - rows * LANE

    # <128-element tail: tiny plain-JAX sum (no O(n) pad pass over the inputs).
    tail = jnp.float32(0.0)
    if rem:
        xt = jax.lax.slice(xf, (rows * LANE,), (n,))
        yt = jax.lax.slice(yf, (rows * LANE,), (n,))
        tail = jnp.sum(_pointwise(xt, yt, eps))
    if rows == 0:
        return tail

    if rem == 0:
        x2 = xf.reshape(rows, LANE)          # pure bitcast, zero-copy
        y2 = yf.reshape(rows, LANE)
    else:
        # 128-aligned prefix for the kernel (misaligned sizes only).
        x2 = jax.lax.slice(xf, (0,), (rows * LANE,)).reshape(rows, LANE)
        y2 = jax.lax.slice(yf, (0,), (rows * LANE,)).reshape(rows, LANE)

    # Tile sizing: large streaming tiles, multiple of ACC_ROWS sublanes.
    tile_rows = max(ACC_ROWS, min(int(tile_rows), _round_up(rows, ACC_ROWS)))
    tile_rows = _round_up(tile_rows, ACC_ROWS)

    num_blocks = -(-rows // tile_rows)
    # Split blocks over 2 (virtual) cores when there is enough work; on v7x the
    # "parallel" axis is sharded across both TensorCores, on v5e/v6e it simply
    # runs sequentially.
    num_cores = 2 if num_blocks >= 2 else 1
    blocks_per_core = -(-num_blocks // num_cores)
    has_pad_blocks = num_cores * blocks_per_core != num_blocks
    last_block_partial = (rows % tile_rows) != 0
    bf16_diff = (x.dtype == jnp.bfloat16)

    if has_pad_blocks:
        def in_map(c, j, _bpc=blocks_per_core, _nb=num_blocks):
            return (jnp.minimum(c * _bpc + j, _nb - 1), 0)
    else:
        def in_map(c, j, _bpc=blocks_per_core):
            return (c * _bpc + j, 0)

    kernel = functools.partial(
        _charbonnier_kernel,
        eps=float(eps),
        rows_total=rows,
        tile_rows=tile_rows,
        num_blocks=num_blocks,
        blocks_per_core=blocks_per_core,
        has_pad_blocks=has_pad_blocks,
        last_block_partial=last_block_partial,
        bf16_diff=bf16_diff,
    )

    partials = pl.pallas_call(
        kernel,
        out_shape=jax.ShapeDtypeStruct((num_cores, ACC_ROWS, LANE), jnp.float32),
        grid_spec=pltpu.PrefetchScalarGridSpec(
            num_scalar_prefetch=0,
            grid=(num_cores, blocks_per_core),
            in_specs=[
                pl.BlockSpec((tile_rows, LANE), in_map),
                pl.BlockSpec((tile_rows, LANE), in_map),
            ],
            out_specs=pl.BlockSpec((1, ACC_ROWS, LANE), lambda c, j: (c, 0, 0)),
            scratch_shapes=[pltpu.VMEM((ACC_ROWS, LANE), jnp.float32)],
        ),
        compiler_params=pltpu.CompilerParams(
            dimension_semantics=("parallel", "arbitrary"),
            vmem_limit_bytes=32 * 1024 * 1024,
        ),
        cost_estimate=pl.CostEstimate(
            flops=5 * n,
            transcendentals=n,
            bytes_accessed=2 * n * x.dtype.itemsize
            + num_cores * ACC_ROWS * LANE * 4,
        ),
    )(x2, y2)

    return jnp.sum(partials) + tail


def charbonnier_loss_ref(x, y, eps=1e-6):
    # Diff in the input dtype (as PyTorch would), accumulate in f32.
    diff = (x - y).astype(jnp.float32)
    return jnp.sum(jnp.sqrt(diff * diff + jnp.float32(eps)))


if __name__ == "__main__":
    key = jax.random.PRNGKey(0)
    k = jax.random.split(key, 8)

    def check(xa, ya, eps=1e-6, rtol=1e-5, atol=1e-3, **kw):
        got = charbonnier_loss(xa, ya, eps=eps, **kw)
        jax.block_until_ready(got)
        want = charbonnier_loss_ref(xa, ya, eps=eps)
        assert jnp.allclose(got, want, rtol=rtol, atol=atol), (got, want)

    # 1) Typical NCHW image-restoration shape, 128-aligned element count.
    check(jax.random.normal(k[0], (2, 4, 16, 16), jnp.float32),
          jax.random.normal(k[1], (2, 4, 16, 16), jnp.float32))

    # 2) Non-128-aligned element count (aligned-prefix kernel + tiny JAX tail).
    check(jax.random.normal(k[2], (3, 5, 7, 11), jnp.float32),
          jax.random.normal(k[3], (3, 5, 7, 11), jnp.float32))

    # 3) Multi-block 2-core grid with a padding block and a partial tail block.
    check(jax.random.normal(k[4], (2, 4, 22, 128), jnp.float32),
          jax.random.normal(k[5], (2, 4, 22, 128), jnp.float32),
          tile_rows=64)

    # 4) bf16 inputs (diff in bf16, accumulation in f32).
    check(jax.random.normal(k[6], (2, 4, 16, 16), jnp.bfloat16),
          jax.random.normal(k[7], (2, 4, 16, 16), jnp.bfloat16),
          rtol=1e-4, atol=5e-2)

    print("KERNEL_OK")
</pallas_src>

<mosaic_0001>
module attributes {stable_mosaic.version = 11 : i64} {
  func.func @_charbonnier_kernel(%arg0: i32, %arg1: i32, %arg2: memref<32x128xf32, #tpu.memory_space<vmem>>, %arg3: memref<32x128xf32, #tpu.memory_space<vmem>>, %arg4: memref<1x32x128xf32, #tpu.memory_space<vmem>>, %arg5: memref<32x128xf32, #tpu.memory_space<vmem>>) attributes {dimension_semantics = [#tpu.dimension_semantics<parallel>, #tpu.dimension_semantics<arbitrary>], iteration_bounds = array<i64: 1, 1>, scalar_prefetch = 0 : i64, scratch_operands = 1 : i64, tpu.core_type = #tpu.core_type<tc>, window_params = [{transform_indices = @transform_0, window_bounds = array<i64: 32, 128>}, {transform_indices = @transform_1, window_bounds = array<i64: 32, 128>}, {transform_indices = @transform_2, window_bounds = array<i64: 1, 32, 128>}]} {
    %c1_i32 = arith.constant 1 : i32
    %0 = arith.muli %arg0, %c1_i32 : i32
    %1 = arith.addi %0, %arg1 : i32
    %c0_i32 = arith.constant 0 : i32
    %2 = arith.cmpi eq, %arg1, %c0_i32 : i32
    %3 = arith.extui %2 : i1 to i32
    %c0_i32_0 = arith.constant 0 : i32
    %4 = arith.cmpi ne, %3, %c0_i32_0 : i32
    scf.if %4 {
      %cst = arith.constant 0.000000e+00 : f32
      %14 = vector.broadcast %cst : f32 to vector<32x128xf32>
      %c0 = arith.constant 0 : index
      %c0_6 = arith.constant 0 : index
      %15 = vector.load %arg5[%c0, %c0_6] : memref<32x128xf32, #tpu.memory_space<vmem>>, vector<32x128xf32>
      tpu.vector_store %arg5[%c0, %c0_6], %14 {strides = array<i32>} : memref<32x128xf32, #tpu.memory_space<vmem>>, vector<32x128xf32>,
    } else {
    }
    %c0_i32_1 = arith.constant 0 : i32
    %5 = arith.cmpi eq, %1, %c0_i32_1 : i32
    %true = arith.constant true
    %6 = arith.xori %5, %true : i1
    %7 = arith.extui %6 : i1 to i32
    %c0_i32_2 = arith.constant 0 : i32
    %8 = arith.cmpi ne, %7, %c0_i32_2 : i32
    scf.if %8 {
      %c0 = arith.constant 0 : index
      %c0_6 = arith.constant 0 : index
      %14 = vector.load %arg2[%c0, %c0_6] : memref<32x128xf32, #tpu.memory_space<vmem>>, vector<32x128xf32>
      %c0_7 = arith.constant 0 : index
      %c0_8 = arith.constant 0 : index
      %15 = vector.load %arg3[%c0_7, %c0_8] : memref<32x128xf32, #tpu.memory_space<vmem>>, vector<32x128xf32>
      %16 = arith.subf %14, %15 : vector<32x128xf32>
      %17 = arith.mulf %16, %16 : vector<32x128xf32>
      %cst = arith.constant 9.99999997E-7 : f32
      %18 = vector.broadcast %cst : f32 to vector<32x128xf32>
      %19 = arith.addf %17, %18 : vector<32x128xf32>
      %20 = math.sqrt %19 : vector<32x128xf32>
      %c0_9 = arith.constant 0 : index
      %c0_10 = arith.constant 0 : index
      %21 = vector.load %arg5[%c0_9, %c0_10] : memref<32x128xf32, #tpu.memory_space<vmem>>, vector<32x128xf32>
      %22 = vector.shape_cast %20 : vector<32x128xf32> to vector<1x32x128xf32>
      %cst_11 = arith.constant dense<0.000000e+00> : vector<32x128xf32>
      %23 = vector.multi_reduction <add>, %22, %cst_11 [0] : vector<1x32x128xf32> to vector<32x128xf32>
      %24 = arith.addf %21, %23 : vector<32x128xf32>
      %c0_12 = arith.constant 0 : index
      %c0_13 = arith.constant 0 : index
      %25 = vector.load %arg5[%c0_12, %c0_13] : memref<32x128xf32, #tpu.memory_space<vmem>>, vector<32x128xf32>
      tpu.vector_store %arg5[%c0_12, %c0_13], %24 {strides = array<i32>} : memref<32x128xf32, #tpu.memory_space<vmem>>, vector<32x128xf32>,
    } else {
    }
    %9 = arith.extui %5 : i1 to i32
    %c0_i32_3 = arith.constant 0 : i32
    %10 = arith.cmpi ne, %9, %c0_i32_3 : i32
    scf.if %10 {
      %c0 = arith.constant 0 : index
      %c0_6 = arith.constant 0 : index
      %14 = vector.load %arg2[%c0, %c0_6] : memref<32x128xf32, #tpu.memory_space<vmem>>, vector<32x128xf32>
      %c0_7 = arith.constant 0 : index
      %c0_8 = arith.constant 0 : index
      %15 = vector.load %arg3[%c0_7, %c0_8] : memref<32x128xf32, #tpu.memory_space<vmem>>, vector<32x128xf32>
      %16 = arith.subf %14, %15 : vector<32x128xf32>
      %17 = arith.mulf %16, %16 : vector<32x128xf32>
      %cst = arith.constant 9.99999997E-7 : f32
      %18 = vector.broadcast %cst : f32 to vector<32x128xf32>
      %19 = arith.addf %17, %18 : vector<32x128xf32>
      %20 = math.sqrt %19 : vector<32x128xf32>
      %21 = tpu.iota {dimensions = array<i32: 0>} : vector<32x128xi32>
      %c32_i32 = arith.constant 32 : i32
      %22 = arith.muli %1, %c32_i32 : i32
      %c16_i32 = arith.constant 16 : i32
      %23 = arith.subi %c16_i32, %22 : i32
      %24 = vector.broadcast %23 : i32 to vector<32x128xi32>
      %25 = arith.cmpi slt, %21, %24 : vector<32x128xi32>
      %cst_9 = arith.constant 0.000000e+00 : f32
      %26 = vector.broadcast %cst_9 : f32 to vector<32x128xf32>
      %27 = arith.select %25, %20, %26 : vector<32x128xi1>, vector<32x128xf32>
      %c0_10 = arith.constant 0 : index
      %c0_11 = arith.constant 0 : index
      %28 = vector.load %arg5[%c0_10, %c0_11] : memref<32x128xf32, #tpu.memory_space<vmem>>, vector<32x128xf32>
      %29 = vector.shape_cast %27 : vector<32x128xf32> to vector<1x32x128xf32>
      %cst_12 = arith.constant dense<0.000000e+00> : vector<32x128xf32>
      %30 = vector.multi_reduction <add>, %29, %cst_12 [0] : vector<1x32x128xf32> to vector<32x128xf32>
      %31 = arith.addf %28, %30 : vector<32x128xf32>
      %c0_13 = arith.constant 0 : index
      %c0_14 = arith.constant 0 : index
      %32 = vector.load %arg5[%c0_13, %c0_14] : memref<32x128xf32, #tpu.memory_space<vmem>>, vector<32x128xf32>
      tpu.vector_store %arg5[%c0_13, %c0_14], %31 {strides = array<i32>} : memref<32x128xf32, #tpu.memory_space<vmem>>, vector<32x128xf32>,
    } else {
    }
    %c0_i32_4 = arith.constant 0 : i32
    %11 = arith.cmpi eq, %arg1, %c0_i32_4 : i32
    %12 = arith.extui %11 : i1 to i32
    %c0_i32_5 = arith.constant 0 : i32
    %13 = arith.cmpi ne, %12, %c0_i32_5 : i32
    scf.if %13 {
      %c0 = arith.constant 0 : index
      %c0_6 = arith.constant 0 : index
      %14 = vector.load %arg5[%c0, %c0_6] : memref<32x128xf32, #tpu.memory_space<vmem>>, vector<32x128xf32>
      %c0_7 = arith.constant 0 : index
      %c0_8 = arith.constant 0 : index
      %c0_9 = arith.constant 0 : index
      %15 = vector.load %arg4[%c0_7, %c0_8, %c0_9] : memref<1x32x128xf32, #tpu.memory_space<vmem>>, vector<1x32x128xf32>
      %16 = vector.shape_cast %15 : vector<1x32x128xf32> to vector<32x128xf32>
      %17 = vector.shape_cast %14 : vector<32x128xf32> to vector<1x32x128xf32>
      tpu.vector_store %arg4[%c0_7, %c0_8, %c0_9], %17 {strides = array<i32>} : memref<1x32x128xf32, #tpu.memory_space<vmem>>, vector<1x32x128xf32>,
    } else {
    }
    return
  }
  func.func @transform_0(%arg0: i32, %arg1: i32) -> (i32, i32) {
    %c1_i32 = arith.constant 1 : i32
    %0 = arith.muli %arg0, %c1_i32 : i32
    %1 = arith.addi %0, %arg1 : i32
    %c0_i32 = arith.constant 0 : i32
    %c0_i32_0 = arith.constant 0 : i32
    return %1, %c0_i32 : i32, i32
  }
  func.func @transform_1(%arg0: i32, %arg1: i32) -> (i32, i32) {
    %c1_i32 = arith.constant 1 : i32
    %0 = arith.muli %arg0, %c1_i32 : i32
    %1 = arith.addi %0, %arg1 : i32
    %c0_i32 = arith.constant 0 : i32
    %c0_i32_0 = arith.constant 0 : i32
    return %1, %c0_i32 : i32, i32
  }
  func.func @transform_2(%arg0: i32, %arg1: i32) -> (i32, i32, i32) {
    %c0_i32 = arith.constant 0 : i32
    %c0_i32_0 = arith.constant 0 : i32
    %c0_i32_1 = arith.constant 0 : i32
    return %arg0, %c0_i32, %c0_i32_0 : i32, i32, i32
  }
}

</mosaic_0001>

<llo_original>
// kernel: tpu_custom_call.1
$region0: #{tpu_custom_call.1}
  #allocation0 [shape = 'u32[]', space=smem, size = 0x4, offset = 0x4, fixed_abs, tag = 'smem constant byte address 0x4 - core index']
  #allocation1 [shape = 'u32[144,128]{1,0:T(1,128)}', space=vmem, size = 0x12000, scoped, tag = 'internal scratch']
  #allocation2 [shape = 'f32[32,128]{1,0:T(8,128)}', space=vmem, size = 0x4000, scoped, tag = 'scratch operand']
  %s0 = inlined_call_operand.hbm [shape: f32[16,128], index: 0, kind: input, shape index: {}]
  %s1 = inlined_call_operand.hbm [shape: f32[16,128], index: 1, kind: input, shape index: {}]
  %s2 = inlined_call_operand.hbm [shape: f32[1,32,128], index: 2, kind: output, shape index: {}]
  %s3 = sld [smem:[#allocation0]]
  $region42: #{tpu_custom_call.1} parent=0
    _
  %s5 = ssub.s32 1, %s3
  %s6 = scalar_select 0, %s5, %s3
  $region1: #{tpu_custom_call.1} parent=0
    #allocation3 [shape = 'u8[16384]{0}', space=vmem, size = 0x4000, scoped, tag = 'input window, operand 0, single buffered']
    #allocation4 [shape = 's32[1]{0}', space=sflag, size = 0x4, scoped, tag = 'scoped memory for tpu_custom_call.1']
    #allocation5 [shape = 's32[1]{0}', space=sflag, size = 0x4, scoped, tag = 'scoped memory for tpu_custom_call.1']
    #allocation6 [shape = 'u8[16384]{0}', space=vmem, size = 0x4000, scoped, tag = 'input window, operand 1, single buffered']
    #allocation7 [shape = 's32[1]{0}', space=sflag, size = 0x4, scoped, tag = 'scoped memory for tpu_custom_call.1']
    #allocation8 [shape = 'u8[16384]{0}', space=vmem, size = 0x4000, scoped, tag = 'output window, operand 0, single buffered']
    %7 = vsyncpa [#allocation4], 0
    %8 = vsyncpa [#allocation7], 0
    %9 = vsyncpa [#allocation5], 0
    // Predicated region
    $region2: #{tpu_custom_call.1} parent=1 // pred_check
      _
    $region3: #{tpu_custom_call.1} parent=1 // pred_check_branch
      %11 = sbr.rel (0) target = $region5
    $region4: #{tpu_custom_call.1} parent=1 // pred_region
      %s12 = sadd.s32 0, 0
      %s13 = smul.u32 4, %s12
      %s14 = ssub.s32 2, %s13
      %s15 = smul.u32 128, %s14
      %s17 = ssub.s32 512, %s15
      %18 = vsyncadd [#allocation4], %s17
      %p19 = scmp.ne.s32.totalorder 0, %s15
      %s20 = smul.addr %s13, 128
      %s21 = scalar_lea.hbm %s0, %s20
      %s22 = smul.u32 8, %s14
      %s23 = sshll.u32 [#allocation3], 4
      %s24 = int_to_ptr.vmem [resolvable:$true] %s23
      %s25 = sshll.u32 %s22, 4
      %29 = dma.hbm_to_vmem [thread:$0]  (%p19), %s21, %s25, %s24, [#allocation4], 128, 128, 8
    $region5: #{tpu_custom_call.1} parent=1 // pred_fallthru
      _
    // Predicated region
    $region6: #{tpu_custom_call.1} parent=1 // pred_check
      _
    $region7: #{tpu_custom_call.1} parent=1 // pred_check_branch
      %31 = sbr.rel (0) target = $region9
    $region8: #{tpu_custom_call.1} parent=1 // pred_region
      %s32 = sadd.s32 0, 0
      %s33 = smul.u32 4, %s32
      %s34 = ssub.s32 2, %s33
      %s35 = smul.u32 128, %s34
      %s37 = ssub.s32 512, %s35
      %38 = vsyncadd [#allocation7], %s37
      %p39 = scmp.ne.s32.totalorder 0, %s35
      %s40 = smul.addr %s33, 128
      %s41 = scalar_lea.hbm %s1, %s40
      %s42 = smul.u32 8, %s34
      %s43 = sshll.u32 [#allocation6], 4
      %s44 = int_to_ptr.vmem [resolvable:$true] %s43
      %s45 = sshll.u32 %s42, 4
      %49 = dma.hbm_to_vmem [thread:$0]  (%p39), %s41, %s45, %s44, [#allocation7], 128, 128, 8
    $region9: #{tpu_custom_call.1} parent=1 // pred_fallthru
      _
    // Predicated region
    $region10: #{tpu_custom_call.1} parent=1 // pred_check
      _
    $region11: #{tpu_custom_call.1} parent=1 // pred_check_branch
      %51 = sbr.rel (0) target = $region13
    $region12: #{tpu_custom_call.1} parent=1 // pred_region
      %52 = dma.done [#allocation4], 512
    $region13: #{tpu_custom_call.1} parent=1 // pred_fallthru
      _
    // Predicated region
    $region14: #{tpu_custom_call.1} parent=1 // pred_check
      _
    $region15: #{tpu_custom_call.1} parent=1 // pred_check_branch
      %54 = sbr.rel (0) target = $region17
    $region16: #{tpu_custom_call.1} parent=1 // pred_region
      %55 = dma.done [#allocation7], 512
    $region17: #{tpu_custom_call.1} parent=1 // pred_fallthru
      _
    %s56 = sadd.s32 0, 0
    %s57 = smul.u32 4, %s56
    %s58 = ssub.s32 2, %s57
    %s59 = smul.u32 128, %s58
    %s60 = sadd.s32 0, 0
    %s61 = smul.u32 4, %s60
    %s62 = ssub.s32 2, %s61
    %s63 = smul.u32 128, %s62
    %s64 = sadd.s32 0, 0
    %p65 = scmp.eq.s32.totalorder 0, 0
    // Predicated region
    $region18: #{tpu_custom_call.1} parent=1 // pred_check
      %p66 = pneg %p65
    $region19: #{tpu_custom_call.1} parent=1 // pred_check_branch
      %68 = sbr.rel (%p66) target = $region21
    $region20: #{tpu_custom_call.1} parent=1 // pred_region
      %69 = vst [vmem:[#allocation2] sm:$0xff] 0.0
      %70 = vst [vmem:[#allocation2 + $0x8] sm:$0xff] 0.0
      %71 = vst [vmem:[#allocation2 + $0x10] sm:$0xff] 0.0
      %72 = vst [vmem:[#allocation2 + $0x18] sm:$0xff] 0.0
    $region21: #{tpu_custom_call.1} parent=1 // pred_fallthru
      _
    %p73 = scmp.eq.s32.totalorder %s64, 0
    %p74 = scmp.ne.s32.totalorder %s64, 0
    // Predicated region
    $region22: #{tpu_custom_call.1} parent=1 // pred_check
      %p75 = pneg %p74
    $region23: #{tpu_custom_call.1} parent=1 // pred_check_branch
      %77 = sbr.rel (%p75) target = $region25
    $region24: #{tpu_custom_call.1} parent=1 // pred_region
      %v78 = vld [vmem:[#allocation3] sm:$0xff]
      %v79 = vld [vmem:[#allocation3 + $0x8] sm:$0xff]
      %v80 = vld [vmem:[#allocation3 + $0x10] sm:$0xff]
      %v81 = vld [vmem:[#allocation3 + $0x18] sm:$0xff]
      %v82 = vld [vmem:[#allocation6] sm:$0xff]
      %v83 = vld [vmem:[#allocation6 + $0x8] sm:$0xff]
      %v84 = vld [vmem:[#allocation6 + $0x10] sm:$0xff]
      %v85 = vld [vmem:[#allocation6 + $0x18] sm:$0xff]
      %v86 = vsub.f32 %v78, %v82
      %v87 = vsub.f32 %v79, %v83
      %v88 = vsub.f32 %v80, %v84
      %v89 = vsub.f32 %v81, %v85
      %v90 = vmul.f32 %v86, %v86
      %v91 = vmul.f32 %v87, %v87
      %v92 = vmul.f32 %v88, %v88
      %v93 = vmul.f32 %v89, %v89
      %v94 = vadd.f32 %v90, 1e-06
      %v95 = vadd.f32 %v91, 1e-06
      %v96 = vadd.f32 %v92, 1e-06
      %v97 = vadd.f32 %v93, 1e-06
      %v98 = vrsqrt.pop %v94
      %v99 = vmul.f32 %v94, %v98
      %vm100 = vcmp.eq.f32.partialorder %v94, inf
      %v101 = vsel %vm100, %v94, %v99
      %vm102 = vcmp.eq.f32.partialorder %v94, 0.0
      %v103 = vand.u32 %v94, 2147483648
      %v104 = vsel %vm102, %v103, %v101
      %v105 = vrsqrt.pop %v95
      %v106 = vmul.f32 %v95, %v105
      %vm107 = vcmp.eq.f32.partialorder %v95, inf
      %v108 = vsel %vm107, %v95, %v106
      %vm109 = vcmp.eq.f32.partialorder %v95, 0.0
      %v110 = vand.u32 %v95, 2147483648
      %v111 = vsel %vm109, %v110, %v108
      %v112 = vrsqrt.pop %v96
      %v113 = vmul.f32 %v96, %v112
      %vm114 = vcmp.eq.f32.partialorder %v96, inf
      %v115 = vsel %vm114, %v96, %v113
      %vm116 = vcmp.eq.f32.partialorder %v96, 0.0
      %v117 = vand.u32 %v96, 2147483648
      %v118 = vsel %vm116, %v117, %v115
      %v119 = vrsqrt.pop %v97
      %v120 = vmul.f32 %v97, %v119
      %vm121 = vcmp.eq.f32.partialorder %v97, inf
      %v122 = vsel %vm121, %v97, %v120
      %vm123 = vcmp.eq.f32.partialorder %v97, 0.0
      %v124 = vand.u32 %v97, 2147483648
      %v125 = vsel %vm123, %v124, %v122
      %v126 = vld [vmem:[#allocation2] sm:$0xff]
      %v127 = vld [vmem:[#allocation2 + $0x8] sm:$0xff]
      %v128 = vld [vmem:[#allocation2 + $0x10] sm:$0xff]
      %v129 = vld [vmem:[#allocation2 + $0x18] sm:$0xff]
      %v130 = vadd.f32 %v104, 0.0
      %v131 = vadd.f32 %v111, 0.0
      %v132 = vadd.f32 %v118, 0.0
      %v133 = vadd.f32 %v125, 0.0
      %v134 = vadd.f32 %v126, %v130
      %v135 = vadd.f32 %v127, %v131
      %v136 = vadd.f32 %v128, %v132
      %v137 = vadd.f32 %v129, %v133
      %138 = vst [vmem:[#allocation2] sm:$0xff] %v134
      %139 = vst [vmem:[#allocation2 + $0x8] sm:$0xff] %v135
      %140 = vst [vmem:[#allocation2 + $0x10] sm:$0xff] %v136
      %141 = vst [vmem:[#allocation2 + $0x18] sm:$0xff] %v137
    $region25: #{tpu_custom_call.1} parent=1 // pred_fallthru
      _
    // Predicated region
    $region26: #{tpu_custom_call.1} parent=1 // pred_check
      %p142 = pneg %p73
    $region27: #{tpu_custom_call.1} parent=1 // pred_check_branch
      %144 = sbr.rel (%p142) target = $region29
    $region28: #{tpu_custom_call.1} parent=1 // pred_region
      %v145 = vld [vmem:[#allocation3] sm:$0xff]
      %v146 = vld [vmem:[#allocation3 + $0x8] sm:$0xff]
      %v147 = vld [vmem:[#allocation3 + $0x10] sm:$0xff]
      %v148 = vld [vmem:[#allocation3 + $0x18] sm:$0xff]
      %v149 = vld [vmem:[#allocation6] sm:$0xff]
      %v150 = vld [vmem:[#allocation6 + $0x8] sm:$0xff]
      %v151 = vld [vmem:[#allocation6 + $0x10] sm:$0xff]
      %v152 = vld [vmem:[#allocation6 + $0x18] sm:$0xff]
      %v153 = vsub.f32 %v145, %v149
      %v154 = vsub.f32 %v146, %v150
      %v155 = vsub.f32 %v147, %v151
      %v156 = vsub.f32 %v148, %v152
      %v157 = vmul.f32 %v153, %v153
      %v158 = vmul.f32 %v154, %v154
      %v159 = vmul.f32 %v155, %v155
      %v160 = vmul.f32 %v156, %v156
      %v161 = vadd.f32 %v157, 1e-06
      %v162 = vadd.f32 %v158, 1e-06
      %v163 = vadd.f32 %v159, 1e-06
      %v164 = vadd.f32 %v160, 1e-06
      %v165 = vrsqrt.pop %v161
      %v166 = vmul.f32 %v161, %v165
      %vm167 = vcmp.eq.f32.partialorder %v161, inf
      %v168 = vsel %vm167, %v161, %v166
      %vm169 = vcmp.eq.f32.partialorder %v161, 0.0
      %v170 = vand.u32 %v161, 2147483648
      %v171 = vsel %vm169, %v170, %v168
      %v172 = vrsqrt.pop %v162
      %v173 = vmul.f32 %v162, %v172
      %vm174 = vcmp.eq.f32.partialorder %v162, inf
      %v175 = vsel %vm174, %v162, %v173
      %vm176 = vcmp.eq.f32.partialorder %v162, 0.0
      %v177 = vand.u32 %v162, 2147483648
      %v178 = vsel %vm176, %v177, %v175
      %v179 = vrsqrt.pop %v163
      %v180 = vmul.f32 %v163, %v179
      %vm181 = vcmp.eq.f32.partialorder %v163, inf
      %v182 = vsel %vm181, %v163, %v180
      %vm183 = vcmp.eq.f32.partialorder %v163, 0.0
      %v184 = vand.u32 %v163, 2147483648
      %v185 = vsel %vm183, %v184, %v182
      %v186 = vrsqrt.pop %v164
      %v187 = vmul.f32 %v164, %v186
      %vm188 = vcmp.eq.f32.partialorder %v164, inf
      %v189 = vsel %vm188, %v164, %v187
      %vm190 = vcmp.eq.f32.partialorder %v164, 0.0
      %v191 = vand.u32 %v164, 2147483648
      %v192 = vsel %vm190, %v191, %v189
      %v193 = vlaneseq
      %v194 = vshrl.u32 %v193, 7
      %v195 = vadd.s32 %v194, 8
      %v196 = vadd.s32 %v194, 16
      %v197 = vadd.s32 %v194, 24
      %s198 = smul.u32 %s64, 32
      %s199 = ssub.s32 16, %s198
      %v200 = vstv %s199
      %vm201 = vcmp.lt.s32.totalorder %v194, %v200
      %vm202 = vcmp.lt.s32.totalorder %v195, %v200
      %vm203 = vcmp.lt.s32.totalorder %v196, %v200
      %vm204 = vcmp.lt.s32.totalorder %v197, %v200
      %v205 = vsel %vm201, %v171, 0.0
      %v206 = vsel %vm202, %v178, 0.0
      %v207 = vsel %vm203, %v185, 0.0
      %v208 = vsel %vm204, %v192, 0.0
      %v209 = vld [vmem:[#allocation2] sm:$0xff]
      %v210 = vld [vmem:[#allocation2 + $0x8] sm:$0xff]
      %v211 = vld [vmem:[#allocation2 + $0x10] sm:$0xff]
      %v212 = vld [vmem:[#allocation2 + $0x18] sm:$0xff]
      %v213 = vadd.f32 %v205, 0.0
      %v214 = vadd.f32 %v206, 0.0
      %v215 = vadd.f32 %v207, 0.0
      %v216 = vadd.f32 %v208, 0.0
      %v217 = vadd.f32 %v209, %v213
      %v218 = vadd.f32 %v210, %v214
      %v219 = vadd.f32 %v211, %v215
      %v220 = vadd.f32 %v212, %v216
      %221 = vst [vmem:[#allocation2] sm:$0xff] %v217
      %222 = vst [vmem:[#allocation2 + $0x8] sm:$0xff] %v218
      %223 = vst [vmem:[#allocation2 + $0x10] sm:$0xff] %v219
      %224 = vst [vmem:[#allocation2 + $0x18] sm:$0xff] %v220
    $region29: #{tpu_custom_call.1} parent=1 // pred_fallthru
      _
    // Predicated region
    $region30: #{tpu_custom_call.1} parent=1 // pred_check
      %p225 = pneg %p65
    $region31: #{tpu_custom_call.1} parent=1 // pred_check_branch
      %227 = sbr.rel (%p225) target = $region33
    $region32: #{tpu_custom_call.1} parent=1 // pred_region
      %v228 = vld [vmem:[#allocation2] sm:$0xff]
      %v229 = vld [vmem:[#allocation2 + $0x8] sm:$0xff]
      %v230 = vld [vmem:[#allocation2 + $0x10] sm:$0xff]
      %v231 = vld [vmem:[#allocation2 + $0x18] sm:$0xff]
      %232 = vst [vmem:[#allocation8] sm:$0xff] %v228
      %233 = vst [vmem:[#allocation8 + $0x8] sm:$0xff] %v229
      %234 = vst [vmem:[#allocation8 + $0x10] sm:$0xff] %v230
      %235 = vst [vmem:[#allocation8 + $0x18] sm:$0xff] %v231
    $region33: #{tpu_custom_call.1} parent=1 // pred_fallthru
      _
    // Predicated region
    $region34: #{tpu_custom_call.1} parent=1 // pred_check
      _
    $region35: #{tpu_custom_call.1} parent=1 // pred_check_branch
      %237 = sbr.rel (0) target = $region37
    $region36: #{tpu_custom_call.1} parent=1 // pred_region
      %s239 = ssub.s32 512, 512
      %240 = vsyncadd [#allocation5], %s239
      %s241 = sshll.u32 [#allocation8], 4
      %s242 = int_to_ptr.vmem [resolvable:$true] %s241
      %247 = dma.vmem_to_hbm [thread:$0]  %s242, 512, %s2, [#allocation5], 128, 128, 8
    $region37: #{tpu_custom_call.1} parent=1 // pred_fallthru
      _
    // Predicated region
    $region38: #{tpu_custom_call.1} parent=1 // pred_check
      _
    $region39: #{tpu_custom_call.1} parent=1 // pred_check_branch
      %249 = sbr.rel (0) target = $region41
    $region40: #{tpu_custom_call.1} parent=1 // pred_region
      %250 = dma.done [#allocation5], 512
    $region41: #{tpu_custom_call.1} parent=1 // pred_fallthru
      _
    %251 = vsyncpa [#allocation4], 1
    %252 = vsyncpa [#allocation7], 1
    %253 = vsyncpa [#allocation5], 1

</llo_original>
